<compile_context>
chip_gen: v7x
topology: tpu7x:2x2x1
jax: 0.10.0
libtpu: 0.0.40
codegen_flags: <defaults>
</compile_context>

<pallas_src>
import jax
import jax.numpy as jnp
from jax.experimental import pallas as pl
from jax.experimental.pallas import tpu as pltpu

_BN_EPS = 1e-5
_LANE = 128
_DEFAULT_M_TILE = 512                 # fits comfortably in v7x's smaller VMEM
_VMEM_LIMIT = 48 * 1024 * 1024        # > v5e/v6e scoped default, < v7x physical


def _round_up(x, m):
    return (x + m - 1) // m * m


def _pad2(x, mp, kp):
    m, k = x.shape
    return jnp.pad(x, ((0, mp - m), (0, kp - k)))


# ----------------------------------------------------------------------------
# Pass A kernels: bf16 matmul (f32 acc) + per-tile channel sum / sum-of-squares
# ----------------------------------------------------------------------------
def _matmul_stats_kernel(p_ref, w_ref, y_ref, s_ref):
    y = jnp.dot(p_ref[...], w_ref[...], preferred_element_type=jnp.float32)
    y_ref[...] = y.astype(y_ref.dtype)
    s = jnp.sum(y, axis=0, keepdims=True)            # (1, Cp)
    ss = jnp.sum(y * y, axis=0, keepdims=True)       # (1, Cp)
    pad = jnp.zeros((6, y.shape[1]), jnp.float32)
    s_ref[...] = jnp.concatenate([s, ss, pad], axis=0)          # (8, Cp)


def _dual_matmul_stats_kernel(p_ref, w_ref, xs_ref, ws_ref, y_ref, s_ref):
    # Main conv matmul: written to HBM.
    y = jnp.dot(p_ref[...], w_ref[...], preferred_element_type=jnp.float32)
    y_ref[...] = y.astype(y_ref.dtype)
    # Projection-shortcut 1x1 conv: stats only, recomputed cheaply in Pass B.
    ys = jnp.dot(xs_ref[...], ws_ref[...], preferred_element_type=jnp.float32)
    s = jnp.sum(y, axis=0, keepdims=True)
    ss = jnp.sum(y * y, axis=0, keepdims=True)
    ts = jnp.sum(ys, axis=0, keepdims=True)
    tss = jnp.sum(ys * ys, axis=0, keepdims=True)
    pad = jnp.zeros((4, y.shape[1]), jnp.float32)
    s_ref[...] = jnp.concatenate([s, ss, ts, tss, pad], axis=0)  # (8, Cp)


def _pallas_matmul_stats(p_p, w_p, m_tile):
    mp, kp = p_p.shape
    cp = w_p.shape[1]
    n = mp // m_tile
    return pl.pallas_call(
        _matmul_stats_kernel,
        out_shape=(jax.ShapeDtypeStruct((mp, cp), jnp.bfloat16),
                   jax.ShapeDtypeStruct((8 * n, cp), jnp.float32)),
        grid_spec=pltpu.PrefetchScalarGridSpec(
            num_scalar_prefetch=0,
            grid=(n,),
            in_specs=[pl.BlockSpec((m_tile, kp), lambda i: (i, 0)),
                      pl.BlockSpec((kp, cp), lambda i: (0, 0))],
            out_specs=(pl.BlockSpec((m_tile, cp), lambda i: (i, 0)),
                       pl.BlockSpec((8, cp), lambda i: (i, 0)))),
        compiler_params=pltpu.CompilerParams(
            dimension_semantics=("parallel",),
            vmem_limit_bytes=_VMEM_LIMIT),
    )(p_p, w_p)


def _pallas_dual_matmul_stats(p_p, w_p, xs_p, ws_p, m_tile):
    mp, kp = p_p.shape
    cp = w_p.shape[1]
    ksp = xs_p.shape[1]
    n = mp // m_tile
    return pl.pallas_call(
        _dual_matmul_stats_kernel,
        out_shape=(jax.ShapeDtypeStruct((mp, cp), jnp.bfloat16),
                   jax.ShapeDtypeStruct((8 * n, cp), jnp.float32)),
        grid_spec=pltpu.PrefetchScalarGridSpec(
            num_scalar_prefetch=0,
            grid=(n,),
            in_specs=[pl.BlockSpec((m_tile, kp), lambda i: (i, 0)),
                      pl.BlockSpec((kp, cp), lambda i: (0, 0)),
                      pl.BlockSpec((m_tile, ksp), lambda i: (i, 0)),
                      pl.BlockSpec((ksp, cp), lambda i: (0, 0))],
            out_specs=(pl.BlockSpec((m_tile, cp), lambda i: (i, 0)),
                       pl.BlockSpec((8, cp), lambda i: (i, 0)))),
        compiler_params=pltpu.CompilerParams(
            dimension_semantics=("parallel",),
            vmem_limit_bytes=_VMEM_LIMIT),
    )(p_p, w_p, xs_p, ws_p)


# ----------------------------------------------------------------------------
# Pass B kernels: folded-affine BN apply (+ shortcut) (+ ReLU)
#   ab_ref rows: [a_main, b_main, a_shortcut, b_shortcut, 0, 0, 0, 0]
# ----------------------------------------------------------------------------
def _make_bn_apply_kernel(apply_relu, mode):
    def kernel(*refs):
        if mode == "proj_res":
            y_ref, xs_ref, ws_ref, ab_ref, o_ref = refs
        elif mode == "identity_res":
            y_ref, r_ref, ab_ref, o_ref = refs
        else:  # "plain"
            y_ref, ab_ref, o_ref = refs
        out = y_ref[...].astype(jnp.float32) * ab_ref[0:1, :] + ab_ref[1:2, :]
        if mode == "proj_res":
            # Recompute the cheap 1x1 shortcut matmul on the otherwise-idle MXU
            # instead of round-tripping it through HBM; residual add stays f32.
            ys = jnp.dot(xs_ref[...], ws_ref[...],
                         preferred_element_type=jnp.float32)
            out = out + ys * ab_ref[2:3, :] + ab_ref[3:4, :]
        elif mode == "identity_res":
            out = out + r_ref[...].astype(jnp.float32)
        if apply_relu:
            out = jnp.maximum(out, 0.0)
        o_ref[...] = out.astype(o_ref.dtype)
    return kernel


def _pallas_bn_apply(y_p, ab, m_tile, apply_relu, out_dtype,
                     xs_p=None, ws_p=None, r_p=None):
    mp, cp = y_p.shape
    n = mp // m_tile
    if xs_p is not None:
        mode = "proj_res"
        ksp = xs_p.shape[1]
        inputs = [y_p, xs_p, ws_p, ab]
        in_specs = [pl.BlockSpec((m_tile, cp), lambda i: (i, 0)),
                    pl.BlockSpec((m_tile, ksp), lambda i: (i, 0)),
                    pl.BlockSpec((ksp, cp), lambda i: (0, 0)),
                    pl.BlockSpec((8, cp), lambda i: (0, 0))]
    elif r_p is not None:
        mode = "identity_res"
        inputs = [y_p, r_p, ab]
        in_specs = [pl.BlockSpec((m_tile, cp), lambda i: (i, 0)),
                    pl.BlockSpec((m_tile, cp), lambda i: (i, 0)),
                    pl.BlockSpec((8, cp), lambda i: (0, 0))]
    else:
        mode = "plain"
        inputs = [y_p, ab]
        in_specs = [pl.BlockSpec((m_tile, cp), lambda i: (i, 0)),
                    pl.BlockSpec((8, cp), lambda i: (0, 0))]
    return pl.pallas_call(
        _make_bn_apply_kernel(apply_relu, mode),
        out_shape=jax.ShapeDtypeStruct((mp, cp), out_dtype),
        grid_spec=pltpu.PrefetchScalarGridSpec(
            num_scalar_prefetch=0,
            grid=(n,),
            in_specs=in_specs,
            out_specs=pl.BlockSpec((m_tile, cp), lambda i: (i, 0))),
        compiler_params=pltpu.CompilerParams(
            dimension_semantics=("parallel",),
            vmem_limit_bytes=_VMEM_LIMIT),
    )(*inputs)


# ----------------------------------------------------------------------------
# BN affine folding from per-tile partial stats (tiny, done in f32 in XLA)
# ----------------------------------------------------------------------------
def _fold_bn(partials, row_offset, count, gamma, beta, cp):
    n_tiles = partials.shape[0] // 8
    stats = partials.reshape(n_tiles, 8, cp)
    total_sum = jnp.sum(stats[:, row_offset, :], axis=0)        # (Cp,)
    total_sq = jnp.sum(stats[:, row_offset + 1, :], axis=0)     # (Cp,)
    mean = total_sum / count                                    # padded rows are 0
    var = jnp.maximum(total_sq / count - mean * mean, 0.0)
    inv_std = jax.lax.rsqrt(var + _BN_EPS)
    g = jnp.pad(gamma.astype(jnp.float32), (0, cp - gamma.shape[0]))
    bt = jnp.pad(beta.astype(jnp.float32), (0, cp - beta.shape[0]))
    a = g * inv_std
    b = bt - mean * a
    return a, b


def _pack_ab(a, b, cp, a_sc=None, b_sc=None):
    zeros = jnp.zeros((cp,), jnp.float32)
    if a_sc is None:
        a_sc, b_sc = zeros, zeros
    return jnp.stack([a, b, a_sc, b_sc, zeros, zeros, zeros, zeros], axis=0)


# ----------------------------------------------------------------------------
# Glue: im2col (slicing only), weight layout, block wiring
# ----------------------------------------------------------------------------
def _im2col(x_nhwc, ksize, stride, pad):
    N, H, W, C = x_nhwc.shape
    xp = jnp.pad(x_nhwc, ((0, 0), (pad, pad), (pad, pad), (0, 0)))
    Ho = (H + 2 * pad - ksize) // stride + 1
    Wo = (W + 2 * pad - ksize) // stride + 1
    cols = []
    for kh in range(ksize):
        for kw in range(ksize):
            patch = xp[:, kh:kh + Ho * stride:stride, kw:kw + Wo * stride:stride, :]
            cols.append(patch)
    patches = jnp.concatenate(cols, axis=-1)          # (N, Ho, Wo, K*K*C)
    return patches.reshape(N * Ho * Wo, ksize * ksize * C), (N, Ho, Wo)


def _conv3x3_weight_to_matrix(w):
    # PyTorch layout (Cout, Cin, KH, KW) -> (KH*KW*Cin, Cout) matching im2col.
    cout = w.shape[0]
    return jnp.transpose(w, (2, 3, 1, 0)).reshape(-1, cout)


def basic_block_dubn_forward(x_nchw, params, in_planes, mid_planes, out_planes,
                             stride, m_tile=_DEFAULT_M_TILE):
    x = jnp.transpose(x_nchw, (0, 2, 3, 1)).astype(jnp.float32)   # NHWC
    x_bf = x.astype(jnp.bfloat16)                                 # bf16 MXU operand

    # ---------------- conv1 -> DuBN1 -> ReLU ----------------
    p1, (N, Ho, Wo) = _im2col(x_bf, ksize=3, stride=stride, pad=1)
    w1 = _conv3x3_weight_to_matrix(params["conv1_w"]).astype(jnp.bfloat16)
    M1, K1 = p1.shape
    K1p = _round_up(K1, _LANE)
    C1p = _round_up(mid_planes, _LANE)
    Mt1 = min(m_tile, _round_up(M1, _LANE))
    Mp1 = _round_up(M1, Mt1)

    p1_p = _pad2(p1, Mp1, K1p)
    w1_p = _pad2(w1, K1p, C1p)
    y1_p, part1 = _pallas_matmul_stats(p1_p, w1_p, Mt1)
    a1, b1 = _fold_bn(part1, 0, M1, params["bn1_gamma"], params["bn1_beta"], C1p)
    out1_p = _pallas_bn_apply(y1_p, _pack_ab(a1, b1, C1p), Mt1,
                              apply_relu=True, out_dtype=jnp.bfloat16)
    out1 = out1_p[:M1, :mid_planes].reshape(N, Ho, Wo, mid_planes)

    # -------- conv2 -> DuBN2 -> (+ shortcut) -> ReLU (shortcut fused) --------
    p2, _ = _im2col(out1, ksize=3, stride=1, pad=1)
    w2 = _conv3x3_weight_to_matrix(params["conv2_w"]).astype(jnp.bfloat16)
    M2, K2 = p2.shape                                   # M2 == M1
    K2p = _round_up(K2, _LANE)
    C2p = _round_up(out_planes, _LANE)
    Mt2 = min(m_tile, _round_up(M2, _LANE))
    Mp2 = _round_up(M2, Mt2)

    p2_p = _pad2(p2, Mp2, K2p)
    w2_p = _pad2(w2, K2p, C2p)

    has_proj = (stride != 1) or (in_planes != out_planes)
    if has_proj:
        # Projection shortcut: 1x1 strided conv patches are just strided x.
        xs = x_bf[:, ::stride, ::stride, :].reshape(M2, in_planes)
        ws = params["convs_w"].reshape(out_planes, in_planes).T.astype(jnp.bfloat16)
        Ksp = _round_up(in_planes, _LANE)
        xs_p = _pad2(xs, Mp2, Ksp)
        ws_p = _pad2(ws, Ksp, C2p)

        y2_p, part2 = _pallas_dual_matmul_stats(p2_p, w2_p, xs_p, ws_p, Mt2)
        a2, b2 = _fold_bn(part2, 0, M2, params["bn2_gamma"], params["bn2_beta"], C2p)
        asc, bsc = _fold_bn(part2, 2, M2, params["bns_gamma"], params["bns_beta"], C2p)
        out_p = _pallas_bn_apply(y2_p, _pack_ab(a2, b2, C2p, asc, bsc), Mt2,
                                 apply_relu=True, out_dtype=jnp.float32,
                                 xs_p=xs_p, ws_p=ws_p)
    else:
        y2_p, part2 = _pallas_matmul_stats(p2_p, w2_p, Mt2)
        a2, b2 = _fold_bn(part2, 0, M2, params["bn2_gamma"], params["bn2_beta"], C2p)
        r_p = _pad2(x_bf.reshape(M2, out_planes), Mp2, C2p)
        out_p = _pallas_bn_apply(y2_p, _pack_ab(a2, b2, C2p), Mt2,
                                 apply_relu=True, out_dtype=jnp.float32,
                                 r_p=r_p)

    out = out_p[:M2, :out_planes].reshape(N, Ho, Wo, out_planes)
    return jnp.transpose(out, (0, 3, 1, 2))                        # back to NCHW


# ----------------------------------------------------------------------------
# Pure-JAX reference (f32) for a sanity check
# ----------------------------------------------------------------------------
def _ref_bn_train(y_nchw, gamma, beta):
    mean = jnp.mean(y_nchw, axis=(0, 2, 3), keepdims=True)
    var = jnp.mean((y_nchw - mean) ** 2, axis=(0, 2, 3), keepdims=True)
    g = gamma.reshape(1, -1, 1, 1)
    b = beta.reshape(1, -1, 1, 1)
    return (y_nchw - mean) * jax.lax.rsqrt(var + _BN_EPS) * g + b


def _ref_conv(x_nchw, w, stride, pad):
    return jax.lax.conv_general_dilated(
        x_nchw, w, window_strides=(stride, stride),
        padding=((pad, pad), (pad, pad)),
        dimension_numbers=("NCHW", "OIHW", "NCHW"))


def _ref_forward(x, params, in_planes, out_planes, stride):
    out = jax.nn.relu(_ref_bn_train(_ref_conv(x, params["conv1_w"], stride, 1),
                                    params["bn1_gamma"], params["bn1_beta"]))
    out = _ref_bn_train(_ref_conv(out, params["conv2_w"], 1, 1),
                        params["bn2_gamma"], params["bn2_beta"])
    if stride != 1 or in_planes != out_planes:
        sc = _ref_bn_train(_ref_conv(x, params["convs_w"], stride, 0),
                           params["bns_gamma"], params["bns_beta"])
    else:
        sc = x
    return jax.nn.relu(out + sc)


# ----------------------------------------------------------------------------
if __name__ == "__main__":
    key = jax.random.PRNGKey(0)
    in_planes, mid_planes, out_planes, stride = 4, 8, 8, 2
    N, H, W = 2, 16, 16

    keys = jax.random.split(key, 10)
    params = {
        "conv1_w": 0.1 * jax.random.normal(keys[0], (mid_planes, in_planes, 3, 3), jnp.float32),
        "bn1_gamma": 1.0 + 0.1 * jax.random.normal(keys[1], (mid_planes,), jnp.float32),
        "bn1_beta": 0.1 * jax.random.normal(keys[2], (mid_planes,), jnp.float32),
        "conv2_w": 0.1 * jax.random.normal(keys[3], (out_planes, mid_planes, 3, 3), jnp.float32),
        "bn2_gamma": 1.0 + 0.1 * jax.random.normal(keys[4], (out_planes,), jnp.float32),
        "bn2_beta": 0.1 * jax.random.normal(keys[5], (out_planes,), jnp.float32),
        "convs_w": 0.1 * jax.random.normal(keys[6], (out_planes, in_planes, 1, 1), jnp.float32),
        "bns_gamma": 1.0 + 0.1 * jax.random.normal(keys[7], (out_planes,), jnp.float32),
        "bns_beta": 0.1 * jax.random.normal(keys[8], (out_planes,), jnp.float32),
    }
    x = jax.random.normal(keys[9], (N, in_planes, H, W), jnp.float32)   # NCHW, like PyTorch

    out = basic_block_dubn_forward(x, params, in_planes, mid_planes, out_planes, stride)
    out = jax.block_until_ready(out)

    ref = jax.block_until_ready(_ref_forward(x, params, in_planes, out_planes, stride))
    assert out.shape == ref.shape == (N, out_planes, H // stride, W // stride)
    # bf16 MXU operands + bf16 inter-stage activations -> slightly looser check
    assert jnp.allclose(out, ref, atol=4e-2, rtol=4e-2), "mismatch vs JAX reference"

    print("KERNEL_OK")
</pallas_src>

<mosaic_0001>
module attributes {stable_mosaic.version = 11 : i64} {
  func.func @_matmul_stats_kernel(%arg0: i32, %arg1: memref<128x128xbf16, #tpu.memory_space<vmem>>, %arg2: memref<128x128xbf16, #tpu.memory_space<vmem>>, %arg3: memref<128x128xbf16, #tpu.memory_space<vmem>>, %arg4: memref<8x128xf32, #tpu.memory_space<vmem>>) attributes {dimension_semantics = [#tpu.dimension_semantics<parallel>], iteration_bounds = array<i64: 1>, scalar_prefetch = 0 : i64, scratch_operands = 0 : i64, tpu.core_type = #tpu.core_type<tc>, window_params = [{transform_indices = @transform_0, window_bounds = array<i64: 128, 128>}, {pipeline_mode = #tpu.pipeline_mode<synchronous>, transform_indices = @transform_1, window_bounds = array<i64: 128, 128>}, {transform_indices = @transform_2, window_bounds = array<i64: 128, 128>}, {transform_indices = @transform_3, window_bounds = array<i64: 8, 128>}]} {
    %c0 = arith.constant 0 : index
    %c0_0 = arith.constant 0 : index
    %0 = vector.load %arg1[%c0, %c0_0] : memref<128x128xbf16, #tpu.memory_space<vmem>>, vector<128x128xbf16>
    %c0_1 = arith.constant 0 : index
    %c0_2 = arith.constant 0 : index
    %1 = vector.load %arg2[%c0_1, %c0_2] : memref<128x128xbf16, #tpu.memory_space<vmem>>, vector<128x128xbf16>
    %cst = arith.constant dense<0.000000e+00> : vector<128x128xf32>
    %2 = tpu.matmul %0, %1, %cst {dimension_numbers = #tpu.dot_dimension_numbers<[1], [0], [0], [1], [0, 0, 1, 1], [], []>} : vector<128x128xbf16>, vector<128x128xbf16>, vector<128x128xf32> -> vector<128x128xf32>
    %3 = arith.truncf %2 : vector<128x128xf32> to vector<128x128xbf16>
    %c0_3 = arith.constant 0 : index
    %c0_4 = arith.constant 0 : index
    %4 = vector.load %arg3[%c0_3, %c0_4] : memref<128x128xbf16, #tpu.memory_space<vmem>>, vector<128x128xbf16>
    tpu.vector_store %arg3[%c0_3, %c0_4], %3 {strides = array<i32>} : memref<128x128xbf16, #tpu.memory_space<vmem>>, vector<128x128xbf16>,
    %cst_5 = arith.constant dense<0.000000e+00> : vector<128xf32>
    %5 = vector.multi_reduction <add>, %2, %cst_5 [0] : vector<128x128xf32> to vector<128xf32>
    %6 = vector.shape_cast %5 : vector<128xf32> to vector<1x128xf32>
    %7 = arith.mulf %2, %2 : vector<128x128xf32>
    %cst_6 = arith.constant dense<0.000000e+00> : vector<128xf32>
    %8 = vector.multi_reduction <add>, %7, %cst_6 [0] : vector<128x128xf32> to vector<128xf32>
    %9 = vector.shape_cast %8 : vector<128xf32> to vector<1x128xf32>
    %cst_7 = arith.constant 0.000000e+00 : f32
    %10 = vector.broadcast %cst_7 : f32 to vector<6x128xf32>
    %11 = tpu.concatenate %6, %9, %10 in 0 : vector<1x128xf32>, vector<1x128xf32>, vector<6x128xf32> -> vector<8x128xf32>
    %c0_8 = arith.constant 0 : index
    %c0_9 = arith.constant 0 : index
    %12 = vector.load %arg4[%c0_8, %c0_9] : memref<8x128xf32, #tpu.memory_space<vmem>>, vector<8x128xf32>
    tpu.vector_store %arg4[%c0_8, %c0_9], %11 {strides = array<i32>} : memref<8x128xf32, #tpu.memory_space<vmem>>, vector<8x128xf32>,
    return
  }
  func.func @transform_0(%arg0: i32) -> (i32, i32) {
    %c0_i32 = arith.constant 0 : i32
    %c0_i32_0 = arith.constant 0 : i32
    return %arg0, %c0_i32 : i32, i32
  }
  func.func @transform_1(%arg0: i32) -> (i32, i32) {
    %c0_i32 = arith.constant 0 : i32
    %c0_i32_0 = arith.constant 0 : i32
    %c0_i32_1 = arith.constant 0 : i32
    return %c0_i32, %c0_i32_0 : i32, i32
  }
  func.func @transform_2(%arg0: i32) -> (i32, i32) {
    %c0_i32 = arith.constant 0 : i32
    %c0_i32_0 = arith.constant 0 : i32
    return %arg0, %c0_i32 : i32, i32
  }
  func.func @transform_3(%arg0: i32) -> (i32, i32) {
    %c0_i32 = arith.constant 0 : i32
    %c0_i32_0 = arith.constant 0 : i32
    return %arg0, %c0_i32 : i32, i32
  }
}

</mosaic_0001>

<llo_original>
// kernel: tpu_custom_call.1
$region0: #{tpu_custom_call.1}
  #allocation0 [shape = 'u32[]', space=smem, size = 0x4, offset = 0x4, fixed_abs, tag = 'smem constant byte address 0x4 - core index']
  #allocation1 [shape = 'u32[144,128]{1,0:T(1,128)}', space=vmem, size = 0x12000, scoped, tag = 'internal scratch']
  %s0 = inlined_call_operand.hbm [shape: bf16[128,128], index: 0, kind: input, shape index: {}]
  %s1 = inlined_call_operand.hbm [shape: bf16[128,128], index: 1, kind: input, shape index: {}]
  %s2 = inlined_call_operand.hbm [shape: bf16[128,128], index: 2, kind: output, shape index: {0}]
  %s3 = inlined_call_operand.hbm [shape: f32[8,128], index: 3, kind: output, shape index: {1}]
  %4 = xla_tuple %s2, %s3
  %s5 = sld [smem:[#allocation0]]
  $region34: #{tpu_custom_call.1} parent=0
    _
  %s7 = ssub.s32 1, %s5
  %s8 = scalar_select 0, %s7, %s5
  $region1: #{tpu_custom_call.1} parent=0
    #allocation2 [shape = 'u8[32768]{0}', space=vmem, size = 0x8000, scoped, tag = 'input window, operand 0, single buffered']
    #allocation3 [shape = 's32[1]{0}', space=sflag, size = 0x4, scoped, tag = 'scoped memory for tpu_custom_call.1']
    #allocation4 [shape = 's32[1]{0}', space=sflag, size = 0x4, scoped, tag = 'scoped memory for tpu_custom_call.1']
    #allocation5 [shape = 'u8[32768]{0}', space=vmem, size = 0x8000, scoped, tag = 'input window, operand 1, single buffered']
    #allocation6 [shape = 's32[1]{0}', space=sflag, size = 0x4, scoped, tag = 'scoped memory for tpu_custom_call.1']
    #allocation7 [shape = 'u8[32768]{0}', space=vmem, size = 0x8000, scoped, tag = 'output window, operand 0, single buffered']
    #allocation8 [shape = 'u8[4096]{0}', space=vmem, size = 0x1000, scoped, tag = 'output window, operand 1, single buffered']
    #allocation9 [shape = 's32[1]{0}', space=sflag, size = 0x4, scoped, tag = 'scoped memory for tpu_custom_call.1']
    %9 = vsyncpa [#allocation3], 0
    %10 = vsyncpa [#allocation6], 0
    %11 = vsyncpa [#allocation4], 0
    %12 = vsyncpa [#allocation9], 0
    // Predicated region
    $region2: #{tpu_custom_call.1} parent=1 // pred_check
      _
    $region3: #{tpu_custom_call.1} parent=1 // pred_check_branch
      %14 = sbr.rel (0) target = $region5
    $region4: #{tpu_custom_call.1} parent=1 // pred_region
      %s16 = ssub.s32 1024, 1024
      %17 = vsyncadd [#allocation3], %s16
      %s18 = sshll.u32 [#allocation2], 4
      %s19 = int_to_ptr.vmem [resolvable:$true] %s18
      %24 = dma.hbm_to_vmem [thread:$0]  %s0, 1024, %s19, [#allocation3], 64, 64, 4
    $region5: #{tpu_custom_call.1} parent=1 // pred_fallthru
      _
    // Predicated region
    $region6: #{tpu_custom_call.1} parent=1 // pred_check
      _
    $region7: #{tpu_custom_call.1} parent=1 // pred_check_branch
      %26 = sbr.rel (0) target = $region9
    $region8: #{tpu_custom_call.1} parent=1 // pred_region
      %s28 = ssub.s32 1024, 1024
      %29 = vsyncadd [#allocation6], %s28
      %s30 = sshll.u32 [#allocation5], 4
      %s31 = int_to_ptr.vmem [resolvable:$true] %s30
      %36 = dma.hbm_to_vmem [thread:$0]  %s1, 1024, %s31, [#allocation6], 64, 64, 4
    $region9: #{tpu_custom_call.1} parent=1 // pred_fallthru
      _
    // Predicated region
    $region10: #{tpu_custom_call.1} parent=1 // pred_check
      _
    $region11: #{tpu_custom_call.1} parent=1 // pred_check_branch
      %38 = sbr.rel (0) target = $region13
    $region12: #{tpu_custom_call.1} parent=1 // pred_region
      %39 = dma.done [#allocation3], 1024
    $region13: #{tpu_custom_call.1} parent=1 // pred_fallthru
      _
    // Predicated region
    $region14: #{tpu_custom_call.1} parent=1 // pred_check
      _
    $region15: #{tpu_custom_call.1} parent=1 // pred_check_branch
      %41 = sbr.rel (0) target = $region17
    $region16: #{tpu_custom_call.1} parent=1 // pred_region
      %42 = dma.done [#allocation6], 1024
    $region17: #{tpu_custom_call.1} parent=1 // pred_fallthru
      _
    %v44 = vld [vmem:[#allocation2] sm:$0xf]
    %v45 = vld [vmem:[#allocation2 + $0x4] sm:$0xf]
    %v46 = vld [vmem:[#allocation2 + $0x8] sm:$0xf]
    %v47 = vld [vmem:[#allocation2 + $0xc] sm:$0xf]
    %v48 = vld [vmem:[#allocation2 + $0x10] sm:$0xf]
    %v49 = vld [vmem:[#allocation2 + $0x14] sm:$0xf]
    %v50 = vld [vmem:[#allocation2 + $0x18] sm:$0xf]
    %v51 = vld [vmem:[#allocation2 + $0x1c] sm:$0xf]
    %v52 = vld [vmem:[#allocation2 + $0x20] sm:$0xf]
    %v53 = vld [vmem:[#allocation2 + $0x24] sm:$0xf]
    %v54 = vld [vmem:[#allocation2 + $0x28] sm:$0xf]
    %v55 = vld [vmem:[#allocation2 + $0x2c] sm:$0xf]
    %v56 = vld [vmem:[#allocation2 + $0x30] sm:$0xf]
    %v57 = vld [vmem:[#allocation2 + $0x34] sm:$0xf]
    %v58 = vld [vmem:[#allocation2 + $0x38] sm:$0xf]
    %v59 = vld [vmem:[#allocation2 + $0x3c] sm:$0xf]
    %v60 = vld [vmem:[#allocation5] sm:$0xf]
    %v61 = vld [vmem:[#allocation5 + $0x4] sm:$0xf]
    %v62 = vld [vmem:[#allocation5 + $0x8] sm:$0xf]
    %v63 = vld [vmem:[#allocation5 + $0xc] sm:$0xf]
    %v64 = vld [vmem:[#allocation5 + $0x10] sm:$0xf]
    %v65 = vld [vmem:[#allocation5 + $0x14] sm:$0xf]
    %v66 = vld [vmem:[#allocation5 + $0x18] sm:$0xf]
    %v67 = vld [vmem:[#allocation5 + $0x1c] sm:$0xf]
    %v68 = vld [vmem:[#allocation5 + $0x20] sm:$0xf]
    %v69 = vld [vmem:[#allocation5 + $0x24] sm:$0xf]
    %v70 = vld [vmem:[#allocation5 + $0x28] sm:$0xf]
    %v71 = vld [vmem:[#allocation5 + $0x2c] sm:$0xf]
    %v72 = vld [vmem:[#allocation5 + $0x30] sm:$0xf]
    %v73 = vld [vmem:[#allocation5 + $0x34] sm:$0xf]
    %v74 = vld [vmem:[#allocation5 + $0x38] sm:$0xf]
    %v75 = vld [vmem:[#allocation5 + $0x3c] sm:$0xf]
    %v92 = vunpack.c.l.b16 %v44
    %v93 = vunpack.c.l.b16 %v45
    %v94 = vunpack.c.l.b16 %v46
    %v95 = vunpack.c.l.b16 %v47
    %v96 = vunpack.c.l.b16 %v48
    %v97 = vunpack.c.l.b16 %v49
    %v98 = vunpack.c.l.b16 %v50
    %v99 = vunpack.c.l.b16 %v51
    %v100 = vunpack.c.l.b16 %v52
    %v101 = vunpack.c.l.b16 %v53
    %v102 = vunpack.c.l.b16 %v54
    %v103 = vunpack.c.l.b16 %v55
    %v104 = vunpack.c.l.b16 %v56
    %v105 = vunpack.c.l.b16 %v57
    %v106 = vunpack.c.l.b16 %v58
    %v107 = vunpack.c.l.b16 %v59
    %v108 = vpack.c.b16 %v93, %v92
    %v109 = vpack.c.b16 %v95, %v94
    %v110 = vpack.c.b16 %v97, %v96
    %v111 = vpack.c.b16 %v99, %v98
    %v112 = vpack.c.b16 %v101, %v100
    %v113 = vpack.c.b16 %v103, %v102
    %v114 = vpack.c.b16 %v105, %v104
    %v115 = vpack.c.b16 %v107, %v106
    %v140 = vunpack.c.l.b16 %v60
    %v141 = vunpack.c.l.b16 %v61
    %v142 = vunpack.c.l.b16 %v62
    %v143 = vunpack.c.l.b16 %v63
    %v144 = vunpack.c.l.b16 %v64
    %v145 = vunpack.c.l.b16 %v65
    %v146 = vunpack.c.l.b16 %v66
    %v147 = vunpack.c.l.b16 %v67
    %v148 = vunpack.c.l.b16 %v68
    %v149 = vunpack.c.l.b16 %v69
    %v150 = vunpack.c.l.b16 %v70
    %v151 = vunpack.c.l.b16 %v71
    %v152 = vunpack.c.l.b16 %v72
    %v153 = vunpack.c.l.b16 %v73
    %v154 = vunpack.c.l.b16 %v74
    %v155 = vunpack.c.l.b16 %v75
    %v156 = vpack.c.b16 %v141, %v140
    %v157 = vpack.c.b16 %v143, %v142
    %v158 = vpack.c.b16 %v145, %v144
    %v159 = vpack.c.b16 %v147, %v146
    %v160 = vpack.c.b16 %v149, %v148
    %v161 = vpack.c.b16 %v151, %v150
    %v162 = vpack.c.b16 %v153, %v152
    %v163 = vpack.c.b16 %v155, %v154
    %172 = vmatprep.subr.bf16.mxu0 0
    %173 = vmatpush1.bf16.msra.mxu0 %v156
    %174 = vmatprep.subr.bf16.mxu0 0
    %175 = vmatpush1.bf16.msra.mxu0 %v157
    %176 = vmatprep.subr.bf16.mxu0 0
    %177 = vmatpush1.bf16.msra.mxu0 %v158
    %178 = vmatprep.subr.bf16.mxu0 0
    %179 = vmatpush1.bf16.msra.mxu0 %v159
    %180 = vmatprep.subr.bf16.mxu0 0
    %181 = vmatpush1.bf16.msra.mxu0 %v160
    %182 = vmatprep.subr.bf16.mxu0 0
    %183 = vmatpush1.bf16.msra.mxu0 %v161
    %184 = vmatprep.subr.bf16.mxu0 0
    %185 = vmatpush1.bf16.msra.mxu0 %v162
    %186 = vmatprep.subr.bf16.mxu0 0
    %187 = vmatpush1.bf16.msra.mxu0 %v163
    %188 = vmatprep.subr.bf16.mxu0 0
    %189 = vmatpush1.bf16.msra.mxu0 0
    %190 = vmatprep.subr.bf16.mxu0 0
    %191 = vmatpush1.bf16.msra.mxu0 0
    %192 = vmatprep.subr.bf16.mxu0 0
    %193 = vmatpush1.bf16.msra.mxu0 0
    %194 = vmatprep.subr.bf16.mxu0 0
    %195 = vmatpush1.bf16.msra.mxu0 0
    %196 = vmatprep.subr.bf16.mxu0 0
    %197 = vmatpush1.bf16.msra.mxu0 0
    %198 = vmatprep.subr.bf16.mxu0 0
    %199 = vmatpush1.bf16.msra.mxu0 0
    %200 = vmatprep.subr.bf16.mxu0 0
    %201 = vmatpush1.bf16.msra.mxu0 0
    %202 = vmatprep.subr.bf16.mxu0 0
    %203 = vmatpush1.bf16.msra.mxu0 0
    %204 = vmatprep.mubr.bf16.mxu0 0
    %205 = vmatmul.mubr.bf16.gmra.mrb[0].mxu0 %v108
    %v206 = vpop.f32.mrb[0].mxu0
    %v207 = vadd.f32 0.0, %v206
    %v208 = vpop.f32.mrb[0].mxu0
    %v209 = vpop.f32.mrb[0].mxu0
    %v210 = vadd.f32 0.0, %v209
    %v211 = vpop.f32.mrb[0].mxu0
    %212 = vmatprep.mubr.bf16.mxu0 0
    %213 = vmatmul.mubr.bf16.gmra.mrb[0].mxu0 %v109
    %v214 = vpop.f32.mrb[0].mxu0
    %v215 = vadd.f32 0.0, %v214
    %v216 = vpop.f32.mrb[0].mxu0
    %v217 = vpop.f32.mrb[0].mxu0
    %v218 = vadd.f32 0.0, %v217
    %v219 = vpop.f32.mrb[0].mxu0
    %220 = vmatprep.mubr.bf16.mxu0 0
    %221 = vmatmul.mubr.bf16.gmra.mrb[0].mxu0 %v110
    %v222 = vpop.f32.mrb[0].mxu0
    %v223 = vadd.f32 0.0, %v222
    %v224 = vpop.f32.mrb[0].mxu0
    %v225 = vpop.f32.mrb[0].mxu0
    %v226 = vadd.f32 0.0, %v225
    %v227 = vpop.f32.mrb[0].mxu0
    %228 = vmatprep.mubr.bf16.mxu0 0
    %229 = vmatmul.mubr.bf16.gmra.mrb[0].mxu0 %v111
    %v230 = vpop.f32.mrb[0].mxu0
    %v231 = vadd.f32 0.0, %v230
    %v232 = vpop.f32.mrb[0].mxu0
    %v233 = vpop.f32.mrb[0].mxu0
    %v234 = vadd.f32 0.0, %v233
    %v235 = vpop.f32.mrb[0].mxu0
    %236 = vmatprep.mubr.bf16.mxu0 0
    %237 = vmatmul.mubr.bf16.gmra.mrb[0].mxu0 %v112
    %v238 = vpop.f32.mrb[0].mxu0
    %v239 = vadd.f32 0.0, %v238
    %v240 = vpop.f32.mrb[0].mxu0
    %v241 = vpop.f32.mrb[0].mxu0
    %v242 = vadd.f32 0.0, %v241
    %v243 = vpop.f32.mrb[0].mxu0
    %244 = vmatprep.mubr.bf16.mxu0 0
    %245 = vmatmul.mubr.bf16.gmra.mrb[0].mxu0 %v113
    %v246 = vpop.f32.mrb[0].mxu0
    %v247 = vadd.f32 0.0, %v246
    %v248 = vpop.f32.mrb[0].mxu0
    %v249 = vpop.f32.mrb[0].mxu0
    %v250 = vadd.f32 0.0, %v249
    %v251 = vpop.f32.mrb[0].mxu0
    %252 = vmatprep.mubr.bf16.mxu0 0
    %253 = vmatmul.mubr.bf16.gmra.mrb[0].mxu0 %v114
    %v254 = vpop.f32.mrb[0].mxu0
    %v255 = vadd.f32 0.0, %v254
    %v256 = vpop.f32.mrb[0].mxu0
    %v257 = vpop.f32.mrb[0].mxu0
    %v258 = vadd.f32 0.0, %v257
    %v259 = vpop.f32.mrb[0].mxu0
    %260 = vmatprep.mubr.bf16.mxu0 0
    %261 = vmatmul.mubr.bf16.gmra.mrb[0].mxu0 %v115
    %v262 = vpop.f32.mrb[0].mxu0
    %v263 = vadd.f32 0.0, %v262
    %v264 = vpop.f32.mrb[0].mxu0
    %v265 = vpop.f32.mrb[0].mxu0
    %v266 = vadd.f32 0.0, %v265
    %v267 = vpop.f32.mrb[0].mxu0
    %268 = vdwg.mxu0
    %v269 = vpack.c.bf16 %v210, %v207
    %v270 = vpack.c.bf16 %v218, %v215
    %v271 = vpack.c.bf16 %v226, %v223
    %v272 = vpack.c.bf16 %v234, %v231
    %v273 = vpack.c.bf16 %v242, %v239
    %v274 = vpack.c.bf16 %v250, %v247
    %v275 = vpack.c.bf16 %v258, %v255
    %v276 = vpack.c.bf16 %v266, %v263
    %v285 = vunpack.c.l.b16 %v269
    %v286 = vunpack.c.h.b16 %v269
    %v287 = vunpack.c.l.b16 %v270
    %v288 = vunpack.c.h.b16 %v270
    %v289 = vunpack.c.l.b16 %v271
    %v290 = vunpack.c.h.b16 %v271
    %v291 = vunpack.c.l.b16 %v272
    %v292 = vunpack.c.h.b16 %v272
    %v293 = vunpack.c.l.b16 %v273
    %v294 = vunpack.c.h.b16 %v273
    %v295 = vunpack.c.l.b16 %v274
    %v296 = vunpack.c.h.b16 %v274
    %v297 = vunpack.c.l.b16 %v275
    %v298 = vunpack.c.h.b16 %v275
    %v299 = vunpack.c.l.b16 %v276
    %v300 = vunpack.c.h.b16 %v276
    %v301 = vpack.c.b16 %v285, %v285
    %v302 = vpack.c.b16 %v286, %v286
    %v303 = vpack.c.b16 %v287, %v287
    %v304 = vpack.c.b16 %v288, %v288
    %v305 = vpack.c.b16 %v289, %v289
    %v306 = vpack.c.b16 %v290, %v290
    %v307 = vpack.c.b16 %v291, %v291
    %v308 = vpack.c.b16 %v292, %v292
    %v309 = vpack.c.b16 %v293, %v293
    %v310 = vpack.c.b16 %v294, %v294
    %v311 = vpack.c.b16 %v295, %v295
    %v312 = vpack.c.b16 %v296, %v296
    %v313 = vpack.c.b16 %v297, %v297
    %v314 = vpack.c.b16 %v298, %v298
    %v315 = vpack.c.b16 %v299, %v299
    %v316 = vpack.c.b16 %v300, %v300
    %333 = vst [vmem:[#allocation7] sm:$0xf] %v301
    %334 = vst [vmem:[#allocation7 + $0x4] sm:$0xf] %v302
    %335 = vst [vmem:[#allocation7 + $0x8] sm:$0xf] %v303
    %336 = vst [vmem:[#allocation7 + $0xc] sm:$0xf] %v304
    %337 = vst [vmem:[#allocation7 + $0x10] sm:$0xf] %v305
    %338 = vst [vmem:[#allocation7 + $0x14] sm:$0xf] %v306
    %339 = vst [vmem:[#allocation7 + $0x18] sm:$0xf] %v307
    %340 = vst [vmem:[#allocation7 + $0x1c] sm:$0xf] %v308
    %341 = vst [vmem:[#allocation7 + $0x20] sm:$0xf] %v309
    %342 = vst [vmem:[#allocation7 + $0x24] sm:$0xf] %v310
    %343 = vst [vmem:[#allocation7 + $0x28] sm:$0xf] %v311
    %344 = vst [vmem:[#allocation7 + $0x2c] sm:$0xf] %v312
    %345 = vst [vmem:[#allocation7 + $0x30] sm:$0xf] %v313
    %346 = vst [vmem:[#allocation7 + $0x34] sm:$0xf] %v314
    %347 = vst [vmem:[#allocation7 + $0x38] sm:$0xf] %v315
    %348 = vst [vmem:[#allocation7 + $0x3c] sm:$0xf] %v316
    %v349 = vadd.f32 %v207, %v210
    %v350 = vadd.f32 %v349, %v215
    %v351 = vadd.f32 %v350, %v218
    %v352 = vadd.f32 %v351, %v223
    %v353 = vadd.f32 %v352, %v226
    %v354 = vadd.f32 %v353, %v231
    %v355 = vadd.f32 %v354, %v234
    %v356 = vadd.f32 %v355, %v239
    %v357 = vadd.f32 %v356, %v242
    %v358 = vadd.f32 %v357, %v247
    %v359 = vadd.f32 %v358, %v250
    %v360 = vadd.f32 %v359, %v255
    %v361 = vadd.f32 %v360, %v258
    %v362 = vadd.f32 %v361, %v263
    %v363 = vadd.f32 %v362, %v266
    %v364 = vrot.slane %v363, 4
    %v365 = vadd.f32 %v363, %v364
    %v366 = vrot.slane %v365, 2
    %v367 = vadd.f32 %v365, %v366
    %v368 = vrot.slane %v367, 1
    %v369 = vadd.f32 %v367, %v368
    %v370 = vmul.f32 %v207, %v207
    %v371 = vmul.f32 %v210, %v210
    %v372 = vmul.f32 %v215, %v215
    %v373 = vmul.f32 %v218, %v218
    %v374 = vmul.f32 %v223, %v223
    %v375 = vmul.f32 %v226, %v226
    %v376 = vmul.f32 %v231, %v231
    %v377 = vmul.f32 %v234, %v234
    %v378 = vmul.f32 %v239, %v239
    %v379 = vmul.f32 %v242, %v242
    %v380 = vmul.f32 %v247, %v247
    %v381 = vmul.f32 %v250, %v250
    %v382 = vmul.f32 %v255, %v255
    %v383 = vmul.f32 %v258, %v258
    %v384 = vmul.f32 %v263, %v263
    %v385 = vmul.f32 %v266, %v266
    %v386 = vadd.f32 %v370, %v371
    %v387 = vadd.f32 %v386, %v372
    %v388 = vadd.f32 %v387, %v373
    %v389 = vadd.f32 %v388, %v374
    %v390 = vadd.f32 %v389, %v375
    %v391 = vadd.f32 %v390, %v376
    %v392 = vadd.f32 %v391, %v377
    %v393 = vadd.f32 %v392, %v378
    %v394 = vadd.f32 %v393, %v379
    %v395 = vadd.f32 %v394, %v380
    %v396 = vadd.f32 %v395, %v381
    %v397 = vadd.f32 %v396, %v382
    %v398 = vadd.f32 %v397, %v383
    %v399 = vadd.f32 %v398, %v384
    %v400 = vadd.f32 %v399, %v385
    %v401 = vrot.slane %v400, 4
    %v402 = vadd.f32 %v400, %v401
    %v403 = vrot.slane %v402, 2
    %v404 = vadd.f32 %v402, %v403
    %v405 = vrot.slane %v404, 1
    %v406 = vadd.f32 %v404, %v405
    %vm407 = vcmask 1040384
    %v408 = vsel %vm407, %v369, %v406
    %vm409 = vcmask 1041408
    %v410 = vsel %vm409, %v408, 0.0
    %411 = vst [vmem:[#allocation8] sm:$0xff] %v410
    // Predicated region
    $region18: #{tpu_custom_call.1} parent=1 // pred_check
      _
    $region19: #{tpu_custom_call.1} parent=1 // pred_check_branch
      %413 = sbr.rel (0) target = $region21
    $region20: #{tpu_custom_call.1} parent=1 // pred_region
      %s415 = ssub.s32 1024, 1024
      %416 = vsyncadd [#allocation4], %s415
      %s417 = sshll.u32 [#allocation7], 4
      %s418 = int_to_ptr.vmem [resolvable:$true] %s417
      %423 = dma.vmem_to_hbm [thread:$0]  %s418, 1024, %s2, [#allocation4], 64, 64, 4
    $region21: #{tpu_custom_call.1} parent=1 // pred_fallthru
      _
    // Predicated region
    $region22: #{tpu_custom_call.1} parent=1 // pred_check
      _
    $region23: #{tpu_custom_call.1} parent=1 // pred_check_branch
      %425 = sbr.rel (0) target = $region25
    $region24: #{tpu_custom_call.1} parent=1 // pred_region
      %s427 = ssub.s32 128, 128
      %428 = vsyncadd [#allocation9], %s427
      %s430 = sshll.u32 [#allocation8], 4
      %s431 = int_to_ptr.vmem [resolvable:$true] %s430
      %433 = dma.vmem_to_hbm [thread:$0]  %s431, 128, %s3, [#allocation9]
    $region25: #{tpu_custom_call.1} parent=1 // pred_fallthru
      _
    // Predicated region
    $region26: #{tpu_custom_call.1} parent=1 // pred_check
      _
    $region27: #{tpu_custom_call.1} parent=1 // pred_check_branch
      %435 = sbr.rel (0) target = $region29
    $region28: #{tpu_custom_call.1} parent=1 // pred_region
      %436 = dma.done [#allocation4], 1024
    $region29: #{tpu_custom_call.1} parent=1 // pred_fallthru
      _
    // Predicated region
    $region30: #{tpu_custom_call.1} parent=1 // pred_check
      _
    $region31: #{tpu_custom_call.1} parent=1 // pred_check_branch
      %438 = sbr.rel (0) target = $region33
    $region32: #{tpu_custom_call.1} parent=1 // pred_region
      %439 = dma.done [#allocation9], 128
    $region33: #{tpu_custom_call.1} parent=1 // pred_fallthru
      _
    %440 = vsyncpa [#allocation3], 1
    %441 = vsyncpa [#allocation6], 1
    %442 = vsyncpa [#allocation4], 1
    %443 = vsyncpa [#allocation9], 1

</llo_original>
